<compile_context>
chip_gen: v7x
topology: tpu7x:2x2x1
jax: 0.10.0
libtpu: 0.0.40
codegen_flags: <defaults>
</compile_context>

<pallas_src>
import jax
import jax.numpy as jnp
import numpy as np
from jax.experimental import pallas as pl
from jax.experimental.pallas import tpu as pltpu

POOL_K = 7     # F.avg_pool2d(kernel_size=(7,7), stride=(1,1))
BN_EPS = 1e-5  # nn.BatchNorm2d default eps
LANE = 128
SUBLANE = 8


def _round_up(v, m):
    return (v + m - 1) // m * m


def _classfy_head_kernel(x_ref, p_ref, w1_ref, shift_ref, w2_ref, b2_ref, o_ref):
    # x_ref: (b_tile, HWp, Cin) bf16          p_ref: (b_tile*HWop, b_tile*HWp) bf16
    # w1_ref: (Cin, mid) bf16 (BN folded)     shift_ref: (1, mid) f32
    # w2_ref: (mid, OUP_PAD) bf16 (1/49 folded)  b2_ref: (1, OUP_PAD) f32
    # o_ref: (b_tile, HWop, OUP_PAD) f32
    bt, hwp, cin = x_ref.shape
    hwop = o_ref.shape[1]

    # Conv1 (1x1, BN scale pre-folded) over the whole batch tile at once.
    x = x_ref[...].reshape(bt * hwp, cin)                                  # aligned merge (hwp % 8 == 0)
    y = jnp.dot(x, w1_ref[...], preferred_element_type=jnp.float32)       # (bt*hwp, mid)
    y = jnp.maximum(y + shift_ref[...], 0.0)                              # BN shift + ReLU, f32

    # avg_pool2d(7,7,stride 1): one block-diagonal 0/1 matmul (scale lives in w2).
    pooled = jnp.dot(p_ref[...], y.astype(p_ref.dtype),
                     preferred_element_type=jnp.float32)                  # (bt*hwop, mid)

    # Conv2 (1x1 + bias); weights already carry the 1/49 pooling scale.
    out = jnp.dot(pooled.astype(w2_ref.dtype), w2_ref[...],
                  preferred_element_type=jnp.float32) + b2_ref[...]       # (bt*hwop, OUP_PAD)

    o_ref[...] = out.reshape(bt, hwop, -1).astype(o_ref.dtype)            # aligned split (hwop % 8 == 0)


def _pick_b_tile(n, cap=8):
    """Largest divisor of n that is <= cap and still leaves >= 2 grid steps."""
    if n <= 1:
        return 1
    best = 1
    for bt in range(1, min(n // 2, cap) + 1):
        if n % bt == 0:
            best = bt
    return best


def _pool_matrix(H, W, H_out, W_out, hwp, hwop):
    """Constant (hwop, hwp) 0/1 matrix selecting each 7x7 window.

    Rows >= H_out*W_out and columns >= H*W are zero (spatial padding)."""
    P = np.zeros((hwop, hwp), np.float32)
    for oi in range(H_out):
        for oj in range(W_out):
            r = oi * W_out + oj
            for di in range(POOL_K):
                for dj in range(POOL_K):
                    P[r, (oi + di) * W + (oj + dj)] = 1.0
    return P


def classfy_head_forward(middle_feats, params):
    """Pallas forward.  middle_feats: list, element 0 is NCHW (N, Cin, H, W)."""
    x = middle_feats[0]
    N, Cin, H, W = x.shape
    mid = params["conv1_w"].shape[0]
    oup = params["conv2_w"].shape[0]
    assert H >= POOL_K and W >= POOL_K, "feature map smaller than the 7x7 pool window"

    H_out, W_out = H - POOL_K + 1, W - POOL_K + 1
    HW, HWo = H * W, H_out * W_out
    HWp = _round_up(HW, SUBLANE)      # spatial rows padded per element
    HWop = _round_up(HWo, SUBLANE)    # pooled rows padded per element
    oup_pad = _round_up(oup, LANE)    # lane-dense output channels

    # ---- host-side glue (plain JAX / numpy) ----
    # Fold eval-mode BatchNorm scale into conv1 weights; keep shift separate.
    scale = params["bn_gamma"] / jnp.sqrt(params["bn_var"] + BN_EPS)              # (mid,)
    shift_f = (params["bn_beta"] - params["bn_mean"] * scale).reshape(1, mid)
    shift_f = shift_f.astype(jnp.float32)
    w1_b = (params["conv1_w"].astype(jnp.float32).T * scale[None, :]).astype(jnp.bfloat16)  # (Cin, mid)

    # NCHW -> (N, HWp, Cin); bf16 matmul operand, zero rows for the spatial pad.
    x_flat = jnp.transpose(x, (0, 2, 3, 1)).reshape(N, HW, Cin)
    x_flat = jnp.pad(x_flat, ((0, 0), (0, HWp - HW), (0, 0))).astype(jnp.bfloat16)

    # Conv2 weight with the 1/49 pooling scale folded in (f32 math, then bf16);
    # output channels zero-padded to a full 128-lane slab.
    w2_t = params["conv2_w"].astype(jnp.float32).T / float(POOL_K * POOL_K)       # (mid, oup)
    w2_pad = jnp.zeros((mid, oup_pad), jnp.float32).at[:, :oup].set(w2_t).astype(jnp.bfloat16)
    b2_pad = jnp.zeros((1, oup_pad), jnp.float32).at[:, :oup].set(
        params["conv2_b"].reshape(1, oup).astype(jnp.float32))

    b_tile = _pick_b_tile(N)
    grid = (N // b_tile,)

    # Block-diagonal pooling matrix: one (HWop, HWp) block per element of the tile.
    p_base = _pool_matrix(H, W, H_out, W_out, HWp, HWop)
    p_bd = jnp.asarray(np.kron(np.eye(b_tile, dtype=np.float32), p_base), jnp.bfloat16)

    out_full = pl.pallas_call(
        _classfy_head_kernel,
        out_shape=jax.ShapeDtypeStruct((N, HWop, oup_pad), jnp.float32),
        grid=grid,
        in_specs=[
            pl.BlockSpec((b_tile, HWp, Cin), lambda n: (n, 0, 0)),                 # x
            pl.BlockSpec((b_tile * HWop, b_tile * HWp), lambda n: (0, 0)),         # pooling matrix
            pl.BlockSpec((Cin, mid), lambda n: (0, 0)),                            # conv1 (BN-folded)
            pl.BlockSpec((1, mid), lambda n: (0, 0)),                              # BN shift
            pl.BlockSpec((mid, oup_pad), lambda n: (0, 0)),                        # conv2 weight (/49, padded)
            pl.BlockSpec((1, oup_pad), lambda n: (0, 0)),                          # conv2 bias (padded)
        ],
        out_specs=pl.BlockSpec((b_tile, HWop, oup_pad), lambda n: (n, 0, 0)),
        compiler_params=pltpu.CompilerParams(dimension_semantics=("parallel",)),
    )(x_flat, p_bd, w1_b, shift_f, w2_pad, b2_pad)

    # (N, HWop, oup_pad) -> slice pads -> NCHW (N, oup, H_out, W_out)
    out = out_full[:, :HWo, :oup].reshape(N, H_out, W_out, oup)
    return jnp.transpose(out, (0, 3, 1, 2))


def reference_forward(x, p):
    """Pure-JAX NCHW reference mirroring the PyTorch module (eval-mode BN), f32."""
    N, Cin, H, W = x.shape
    y = jnp.einsum("nchw,mc->nmhw", x, p["conv1_w"])
    scale = p["bn_gamma"] / jnp.sqrt(p["bn_var"] + BN_EPS)
    shift = p["bn_beta"] - p["bn_mean"] * scale
    y = y * scale[None, :, None, None] + shift[None, :, None, None]
    y = jnp.maximum(y, 0.0)
    H_out, W_out = H - POOL_K + 1, W - POOL_K + 1
    pooled = jnp.zeros((N, y.shape[1], H_out, W_out), jnp.float32)
    for di in range(POOL_K):
        for dj in range(POOL_K):
            pooled = pooled + y[:, :, di:di + H_out, dj:dj + W_out]
    pooled = pooled / float(POOL_K * POOL_K)
    return jnp.einsum("nmhw,om->nohw", pooled, p["conv2_w"]) + p["conv2_b"][None, :, None, None]


def make_params(key, inp, mid, oup):
    """Deterministic synthetic parameters matching the module's shapes."""
    ks = jax.random.split(key, 7)
    return {
        "conv1_w": jax.random.normal(ks[0], (mid, inp), jnp.float32) * 0.1,   # (mid,inp,1,1) squeezed
        "bn_gamma": jax.random.uniform(ks[1], (mid,), jnp.float32, 0.5, 1.5),
        "bn_beta": jax.random.normal(ks[2], (mid,), jnp.float32) * 0.1,
        "bn_mean": jax.random.normal(ks[3], (mid,), jnp.float32) * 0.1,
        "bn_var": jax.random.uniform(ks[4], (mid,), jnp.float32, 0.5, 1.5),
        "conv2_w": jax.random.normal(ks[5], (oup, mid), jnp.float32) * 0.1,   # (oup,mid,1,1) squeezed
        "conv2_b": jax.random.normal(ks[6], (oup,), jnp.float32) * 0.1,
    }


if __name__ == "__main__":
    # Small shapes consistent with the head: 7x7 feature map so the 7x7 pool -> 1x1.
    N, INP, MID, OUP, H, W = 2, 16, 32, 10, 7, 7

    root = jax.random.PRNGKey(0)
    k_params, k_x = jax.random.split(root)
    params = make_params(k_params, INP, MID, OUP)
    x = jax.random.normal(k_x, (N, INP, H, W), jnp.float32)

    out = classfy_head_forward([x], params)
    out = jax.block_until_ready(out)

    ref = jax.block_until_ready(reference_forward(x, params))
    assert out.shape == (N, OUP, H - POOL_K + 1, W - POOL_K + 1), out.shape
    # bf16 matmul operands (f32 accumulation / epilogue) -> compare with a loose but
    # safe tolerance against the pure-f32 reference.
    np.testing.assert_allclose(np.asarray(out), np.asarray(ref), rtol=2e-2, atol=2e-2)

    print("KERNEL_OK")
</pallas_src>

<mosaic_0001>
module attributes {stable_mosaic.version = 11 : i64} {
  func.func @_classfy_head_kernel(%arg0: i32, %arg1: memref<1x56x16xbf16, #tpu.memory_space<vmem>>, %arg2: memref<8x56xbf16, #tpu.memory_space<vmem>>, %arg3: memref<16x32xbf16, #tpu.memory_space<vmem>>, %arg4: memref<1x32xf32, #tpu.memory_space<vmem>>, %arg5: memref<32x128xbf16, #tpu.memory_space<vmem>>, %arg6: memref<1x128xf32, #tpu.memory_space<vmem>>, %arg7: memref<1x8x128xf32, #tpu.memory_space<vmem>>) attributes {dimension_semantics = [#tpu.dimension_semantics<parallel>], iteration_bounds = array<i64: 2>, scalar_prefetch = 0 : i64, scratch_operands = 0 : i64, tpu.core_type = #tpu.core_type<tc>, window_params = [{transform_indices = @transform_0, window_bounds = array<i64: 1, 56, 16>}, {pipeline_mode = #tpu.pipeline_mode<synchronous>, transform_indices = @transform_1, window_bounds = array<i64: 8, 56>}, {pipeline_mode = #tpu.pipeline_mode<synchronous>, transform_indices = @transform_2, window_bounds = array<i64: 16, 32>}, {pipeline_mode = #tpu.pipeline_mode<synchronous>, transform_indices = @transform_3, window_bounds = array<i64: 1, 32>}, {pipeline_mode = #tpu.pipeline_mode<synchronous>, transform_indices = @transform_4, window_bounds = array<i64: 32, 128>}, {pipeline_mode = #tpu.pipeline_mode<synchronous>, transform_indices = @transform_5, window_bounds = array<i64: 1, 128>}, {transform_indices = @transform_6, window_bounds = array<i64: 1, 8, 128>}]} {
    %c0 = arith.constant 0 : index
    %c0_0 = arith.constant 0 : index
    %c0_1 = arith.constant 0 : index
    %0 = vector.load %arg1[%c0, %c0_0, %c0_1] : memref<1x56x16xbf16, #tpu.memory_space<vmem>>, vector<1x56x16xbf16>
    %1 = vector.shape_cast %0 : vector<1x56x16xbf16> to vector<56x16xbf16>
    %c0_2 = arith.constant 0 : index
    %c0_3 = arith.constant 0 : index
    %2 = vector.load %arg3[%c0_2, %c0_3] : memref<16x32xbf16, #tpu.memory_space<vmem>>, vector<16x32xbf16>
    %cst = arith.constant dense<0.000000e+00> : vector<56x32xf32>
    %3 = tpu.matmul %1, %2, %cst {dimension_numbers = #tpu.dot_dimension_numbers<[1], [0], [0], [1], [0, 0, 1, 1], [], []>} : vector<56x16xbf16>, vector<16x32xbf16>, vector<56x32xf32> -> vector<56x32xf32>
    %c0_4 = arith.constant 0 : index
    %c0_5 = arith.constant 0 : index
    %4 = vector.load %arg4[%c0_4, %c0_5] : memref<1x32xf32, #tpu.memory_space<vmem>>, vector<1x32xf32>
    %5 = vector.broadcast %4 : vector<1x32xf32> to vector<56x32xf32>
    %6 = arith.addf %3, %5 : vector<56x32xf32>
    %cst_6 = arith.constant 0.000000e+00 : f32
    %7 = vector.broadcast %cst_6 : f32 to vector<56x32xf32>
    %8 = arith.maximumf %6, %7 : vector<56x32xf32>
    %c0_7 = arith.constant 0 : index
    %c0_8 = arith.constant 0 : index
    %9 = vector.load %arg2[%c0_7, %c0_8] : memref<8x56xbf16, #tpu.memory_space<vmem>>, vector<8x56xbf16>
    %10 = arith.truncf %8 : vector<56x32xf32> to vector<56x32xbf16>
    %cst_9 = arith.constant dense<0.000000e+00> : vector<8x32xf32>
    %11 = tpu.matmul %9, %10, %cst_9 {dimension_numbers = #tpu.dot_dimension_numbers<[1], [0], [0], [1], [0, 0, 1, 1], [], []>} : vector<8x56xbf16>, vector<56x32xbf16>, vector<8x32xf32> -> vector<8x32xf32>
    %12 = arith.truncf %11 : vector<8x32xf32> to vector<8x32xbf16>
    %c0_10 = arith.constant 0 : index
    %c0_11 = arith.constant 0 : index
    %13 = vector.load %arg5[%c0_10, %c0_11] : memref<32x128xbf16, #tpu.memory_space<vmem>>, vector<32x128xbf16>
    %cst_12 = arith.constant dense<0.000000e+00> : vector<8x128xf32>
    %14 = tpu.matmul %12, %13, %cst_12 {dimension_numbers = #tpu.dot_dimension_numbers<[1], [0], [0], [1], [0, 0, 1, 1], [], []>} : vector<8x32xbf16>, vector<32x128xbf16>, vector<8x128xf32> -> vector<8x128xf32>
    %c0_13 = arith.constant 0 : index
    %c0_14 = arith.constant 0 : index
    %15 = vector.load %arg6[%c0_13, %c0_14] : memref<1x128xf32, #tpu.memory_space<vmem>>, vector<1x128xf32>
    %16 = vector.broadcast %15 : vector<1x128xf32> to vector<8x128xf32>
    %17 = arith.addf %14, %16 : vector<8x128xf32>
    %18 = vector.shape_cast %17 : vector<8x128xf32> to vector<1x8x128xf32>
    %c0_15 = arith.constant 0 : index
    %c0_16 = arith.constant 0 : index
    %c0_17 = arith.constant 0 : index
    %19 = vector.load %arg7[%c0_15, %c0_16, %c0_17] : memref<1x8x128xf32, #tpu.memory_space<vmem>>, vector<1x8x128xf32>
    tpu.vector_store %arg7[%c0_15, %c0_16, %c0_17], %18 {strides = array<i32>} : memref<1x8x128xf32, #tpu.memory_space<vmem>>, vector<1x8x128xf32>,
    return
  }
  func.func @transform_0(%arg0: i32) -> (i32, i32, i32) {
    %c0_i32 = arith.constant 0 : i32
    %c0_i32_0 = arith.constant 0 : i32
    %c0_i32_1 = arith.constant 0 : i32
    return %arg0, %c0_i32, %c0_i32_0 : i32, i32, i32
  }
  func.func @transform_1(%arg0: i32) -> (i32, i32) {
    %c0_i32 = arith.constant 0 : i32
    %c0_i32_0 = arith.constant 0 : i32
    %c0_i32_1 = arith.constant 0 : i32
    return %c0_i32, %c0_i32_0 : i32, i32
  }
  func.func @transform_2(%arg0: i32) -> (i32, i32) {
    %c0_i32 = arith.constant 0 : i32
    %c0_i32_0 = arith.constant 0 : i32
    %c0_i32_1 = arith.constant 0 : i32
    return %c0_i32, %c0_i32_0 : i32, i32
  }
  func.func @transform_3(%arg0: i32) -> (i32, i32) {
    %c0_i32 = arith.constant 0 : i32
    %c0_i32_0 = arith.constant 0 : i32
    %c0_i32_1 = arith.constant 0 : i32
    return %c0_i32, %c0_i32_0 : i32, i32
  }
  func.func @transform_4(%arg0: i32) -> (i32, i32) {
    %c0_i32 = arith.constant 0 : i32
    %c0_i32_0 = arith.constant 0 : i32
    %c0_i32_1 = arith.constant 0 : i32
    return %c0_i32, %c0_i32_0 : i32, i32
  }
  func.func @transform_5(%arg0: i32) -> (i32, i32) {
    %c0_i32 = arith.constant 0 : i32
    %c0_i32_0 = arith.constant 0 : i32
    %c0_i32_1 = arith.constant 0 : i32
    return %c0_i32, %c0_i32_0 : i32, i32
  }
  func.func @transform_6(%arg0: i32) -> (i32, i32, i32) {
    %c0_i32 = arith.constant 0 : i32
    %c0_i32_0 = arith.constant 0 : i32
    %c0_i32_1 = arith.constant 0 : i32
    return %arg0, %c0_i32, %c0_i32_0 : i32, i32, i32
  }
}

</mosaic_0001>

<llo_original>
// kernel: tpu_custom_call.1
$region0: #{tpu_custom_call.1}
  #allocation0 [shape = 'u32[]', space=smem, size = 0x4, offset = 0x4, fixed_abs, tag = 'smem constant byte address 0x4 - core index']
  #allocation1 [shape = 'u32[144,128]{1,0:T(1,128)}', space=vmem, size = 0x12000, scoped, tag = 'internal scratch']
  %s0 = inlined_call_operand.vmem [shape: bf16[2,56,16], index: 0, kind: input, shape index: {}]
  %s1 = inlined_call_operand.vmem [shape: bf16[8,56], index: 1, kind: input, shape index: {}]
  %s2 = inlined_call_operand.vmem [shape: bf16[16,32], index: 2, kind: input, shape index: {}]
  %s3 = inlined_call_operand.vmem [shape: f32[1,32], index: 3, kind: input, shape index: {}]
  %s4 = inlined_call_operand.vmem [shape: bf16[32,128], index: 4, kind: input, shape index: {}]
  %s5 = inlined_call_operand.vmem [shape: f32[1,128], index: 5, kind: input, shape index: {}]
  %s6 = inlined_call_operand.hbm [shape: f32[2,8,128], index: 6, kind: output, shape index: {}]
  %s7 = sld [smem:[#allocation0]]
  $region57: #{tpu_custom_call.1} parent=0
    _
  %s9 = ssub.s32 1, %s7
  %s10 = scalar_select 0, %s9, %s7
  $region1: #{tpu_custom_call.1} parent=0
    #allocation2 [shape = 'u8[8192]{0}', space=vmem, size = 0x2000, scoped, tag = 'output window, operand 0']
    #allocation3 [shape = 's32[2]{0}', space=sflag, size = 0x8, scoped, tag = 'scoped memory for tpu_custom_call.1']
    %11 = vsyncpa [#allocation3], 0
    %s12 = scalar_lea.sflag [#allocation3], 1
    %13 = vsyncpa %s12, 0
    loop: start=0, step=1, limit=4
    $region2: #{tpu_custom_call.1} parent=1 // loop_pre_header
      _
    $region3: #{tpu_custom_call.1} parent=1 // loop_header
      %s15 = sphi 0, %s19
      %p16 = scmp.ge.s32.totalorder %s15, 4
      %s25 = sphi 0, %s27
      %s28 = sphi 0, %s25
      %s29 = sphi 0, %s28
      %s45 = sphi 0, %s29
      %s49 = sphi 0, %s49
      %s51 = sphi 0, %s49
      %s52 = sphi 0, %s51
      %s66 = sphi 0, %s52
      %s70 = sphi 0, %s70
      %s72 = sphi 0, %s70
      %s73 = sphi 0, %s72
      %s87 = sphi 0, %s73
      %s91 = sphi 0, %s91
      %s93 = sphi 0, %s91
      %s94 = sphi 0, %s93
      %s108 = sphi 0, %s94
      %s112 = sphi 0, %s112
      %s114 = sphi 0, %s112
      %s115 = sphi 0, %s114
      %s129 = sphi 0, %s115
      %s133 = sphi 0, %s133
      %s135 = sphi 0, %s133
      %s136 = sphi 0, %s135
      %s150 = sphi 0, %s136
      %s156 = sphi 0, %s158
      %s159 = sphi 0, %s156
      %s160 = sphi 0, %s159
      %s176 = sphi 0, %s160
    $region4: #{tpu_custom_call.1} parent=1 // loop_header_branch
      %18 = sbr.rel (%p16) target = $region8
    $region5: #{tpu_custom_call.1} parent=1 // loop_body
      %s20 = ssub.s32 %s15, 1
      %s21 = ssub.s32 %s15, 2
      %s22 = sadd.s32 %s15, 1
      %s23 = ssub.s32 %s15, %s22
      %p24 = scmp.eq.s32.totalorder %s23, 0
      %s26 = sadd.s32 %s25, 1
      %s27 = scalar_select %p24, %s25, %s26
      %p30 = pneg %p24
      %p31 = scmp.eq.s32.totalorder %s15, 1
      %p32 = por %p30, %p31
      %p33 = scmp.ne.s32.totalorder %s25, %s28
      %p34 = scmp.eq.s32.totalorder %s15, 0
      %p35 = por %p33, %p34
      %p36 = scmp.ne.s32.totalorder %s25, %s28
      %p37 = scmp.eq.s32.totalorder %s20, 1
      %p38 = por %p36, %p37
      %p39 = scmp.ne.s32.totalorder %s28, %s29
      %p40 = scmp.eq.s32.totalorder %s20, 0
      %p41 = por %p39, %p40
      %p42 = scmp.ne.s32.totalorder %s28, %s29
      %p43 = scmp.eq.s32.totalorder %s21, 1
      %p44 = por %p42, %p43
      %p46 = scmp.ne.s32.totalorder %s29, %s45
      %p47 = scmp.eq.s32.totalorder %s21, 0
      %p48 = por %p46, %p47
      %s50 = sadd.s32 %s49, 1
      %p53 = scmp.eq.s32.totalorder %s15, 1
      %p54 = scmp.ne.s32.totalorder %s49, %s51
      %p55 = scmp.eq.s32.totalorder %s15, 0
      %p56 = por %p54, %p55
      %p57 = scmp.ne.s32.totalorder %s49, %s51
      %p58 = scmp.eq.s32.totalorder %s20, 1
      %p59 = por %p57, %p58
      %p60 = scmp.ne.s32.totalorder %s51, %s52
      %p61 = scmp.eq.s32.totalorder %s20, 0
      %p62 = por %p60, %p61
      %p63 = scmp.ne.s32.totalorder %s51, %s52
      %p64 = scmp.eq.s32.totalorder %s21, 1
      %p65 = por %p63, %p64
      %p67 = scmp.ne.s32.totalorder %s52, %s66
      %p68 = scmp.eq.s32.totalorder %s21, 0
      %p69 = por %p67, %p68
      %s71 = sadd.s32 %s70, 1
      %p74 = scmp.eq.s32.totalorder %s15, 1
      %p75 = scmp.ne.s32.totalorder %s70, %s72
      %p76 = scmp.eq.s32.totalorder %s15, 0
      %p77 = por %p75, %p76
      %p78 = scmp.ne.s32.totalorder %s70, %s72
      %p79 = scmp.eq.s32.totalorder %s20, 1
      %p80 = por %p78, %p79
      %p81 = scmp.ne.s32.totalorder %s72, %s73
      %p82 = scmp.eq.s32.totalorder %s20, 0
      %p83 = por %p81, %p82
      %p84 = scmp.ne.s32.totalorder %s72, %s73
      %p85 = scmp.eq.s32.totalorder %s21, 1
      %p86 = por %p84, %p85
      %p88 = scmp.ne.s32.totalorder %s73, %s87
      %p89 = scmp.eq.s32.totalorder %s21, 0
      %p90 = por %p88, %p89
      %s92 = sadd.s32 %s91, 1
      %p95 = scmp.eq.s32.totalorder %s15, 1
      %p96 = scmp.ne.s32.totalorder %s91, %s93
      %p97 = scmp.eq.s32.totalorder %s15, 0
      %p98 = por %p96, %p97
      %p99 = scmp.ne.s32.totalorder %s91, %s93
      %p100 = scmp.eq.s32.totalorder %s20, 1
      %p101 = por %p99, %p100
      %p102 = scmp.ne.s32.totalorder %s93, %s94
      %p103 = scmp.eq.s32.totalorder %s20, 0
      %p104 = por %p102, %p103
      %p105 = scmp.ne.s32.totalorder %s93, %s94
      %p106 = scmp.eq.s32.totalorder %s21, 1
      %p107 = por %p105, %p106
      %p109 = scmp.ne.s32.totalorder %s94, %s108
      %p110 = scmp.eq.s32.totalorder %s21, 0
      %p111 = por %p109, %p110
      %s113 = sadd.s32 %s112, 1
      %p116 = scmp.eq.s32.totalorder %s15, 1
      %p117 = scmp.ne.s32.totalorder %s112, %s114
      %p118 = scmp.eq.s32.totalorder %s15, 0
      %p119 = por %p117, %p118
      %p120 = scmp.ne.s32.totalorder %s112, %s114
      %p121 = scmp.eq.s32.totalorder %s20, 1
      %p122 = por %p120, %p121
      %p123 = scmp.ne.s32.totalorder %s114, %s115
      %p124 = scmp.eq.s32.totalorder %s20, 0
      %p125 = por %p123, %p124
      %p126 = scmp.ne.s32.totalorder %s114, %s115
      %p127 = scmp.eq.s32.totalorder %s21, 1
      %p128 = por %p126, %p127
      %p130 = scmp.ne.s32.totalorder %s115, %s129
      %p131 = scmp.eq.s32.totalorder %s21, 0
      %p132 = por %p130, %p131
      %s134 = sadd.s32 %s133, 1
      %p137 = scmp.eq.s32.totalorder %s15, 1
      %p138 = scmp.ne.s32.totalorder %s133, %s135
      %p139 = scmp.eq.s32.totalorder %s15, 0
      %p140 = por %p138, %p139
      %p141 = scmp.ne.s32.totalorder %s133, %s135
      %p142 = scmp.eq.s32.totalorder %s20, 1
      %p143 = por %p141, %p142
      %p144 = scmp.ne.s32.totalorder %s135, %s136
      %p145 = scmp.eq.s32.totalorder %s20, 0
      %p146 = por %p144, %p145
      %p147 = scmp.ne.s32.totalorder %s135, %s136
      %p148 = scmp.eq.s32.totalorder %s21, 1
      %p149 = por %p147, %p148
      %p151 = scmp.ne.s32.totalorder %s136, %s150
      %p152 = scmp.eq.s32.totalorder %s21, 0
      %p153 = por %p151, %p152
      %s154 = ssub.s32 %s15, %s22
      %p155 = scmp.eq.s32.totalorder %s154, 0
      %s157 = sadd.s32 %s156, 1
      %s158 = scalar_select %p155, %s156, %s157
      %p161 = pneg %p155
      %p162 = scmp.eq.s32.totalorder %s15, 1
      %p163 = por %p161, %p162
      %p164 = scmp.ne.s32.totalorder %s156, %s159
      %p165 = scmp.eq.s32.totalorder %s15, 0
      %p166 = por %p164, %p165
      %p167 = scmp.ne.s32.totalorder %s156, %s159
      %p168 = scmp.eq.s32.totalorder %s20, 1
      %p169 = por %p167, %p168
      %p170 = scmp.ne.s32.totalorder %s159, %s160
      %p171 = scmp.eq.s32.totalorder %s20, 0
      %p172 = por %p170, %p171
      %p173 = scmp.ne.s32.totalorder %s159, %s160
      %p174 = scmp.eq.s32.totalorder %s21, 1
      %p175 = por %p173, %p174
      %p177 = scmp.ne.s32.totalorder %s160, %s176
      %p178 = scmp.eq.s32.totalorder %s21, 0
      %p179 = por %p177, %p178
      %p180 = scmp.le.s32.totalorder 1, %s15
      %p181 = scmp.lt.s32.totalorder %s15, 3
      %p182 = pnand %p180, %p181
      %p183 = pneg %p182
      // Predicated region
      $region9: #{tpu_custom_call.1} parent=5 // pred_check
        _
      $region10: #{tpu_custom_call.1} parent=5 // pred_check_branch
        %185 = sbr.rel (%p182) target = $region12
      $region11: #{tpu_custom_call.1} parent=5 // pred_region
        %s186 = ssub.s32 %s15, 1
        // Predicated region
        $region13: #{tpu_custom_call.1} parent=11 // pred_check
          %p187 = pneg %p62
        $region14: #{tpu_custom_call.1} parent=11 // pred_check_branch
          %189 = sbr.rel (%p187) target = $region16
        $region15: #{tpu_custom_call.1} parent=11 // pred_region
          _
        $region16: #{tpu_custom_call.1} parent=11 // pred_fallthru
          _
        // Predicated region
        $region17: #{tpu_custom_call.1} parent=11 // pred_check
          %p190 = pneg %p83
        $region18: #{tpu_custom_call.1} parent=11 // pred_check_branch
          %192 = sbr.rel (%p190) target = $region20
        $region19: #{tpu_custom_call.1} parent=11 // pred_region
          _
        $region20: #{tpu_custom_call.1} parent=11 // pred_fallthru
          _
        // Predicated region
        $region21: #{tpu_custom_call.1} parent=11 // pred_check
          %p193 = pneg %p104
        $region22: #{tpu_custom_call.1} parent=11 // pred_check_branch
          %195 = sbr.rel (%p193) target = $region24
        $region23: #{tpu_custom_call.1} parent=11 // pred_region
          _
        $region24: #{tpu_custom_call.1} parent=11 // pred_fallthru
          _
        // Predicated region
        $region25: #{tpu_custom_call.1} parent=11 // pred_check
          %p196 = pneg %p125
        $region26: #{tpu_custom_call.1} parent=11 // pred_check_branch
          %198 = sbr.rel (%p196) target = $region28
        $region27: #{tpu_custom_call.1} parent=11 // pred_region
          _
        $region28: #{tpu_custom_call.1} parent=11 // pred_fallthru
          _
        // Predicated region
        $region29: #{tpu_custom_call.1} parent=11 // pred_check
          %p199 = pneg %p146
        $region30: #{tpu_custom_call.1} parent=11 // pred_check_branch
          %201 = sbr.rel (%p199) target = $region32
        $region31: #{tpu_custom_call.1} parent=11 // pred_region
          _
        $region32: #{tpu_custom_call.1} parent=11 // pred_fallthru
          _
      $region12: #{tpu_custom_call.1} parent=5 // pred_fallthru
        _
      %p202 = scmp.lt.s32.totalorder %s15, 2
      // Predicated region
      $region33: #{tpu_custom_call.1} parent=5 // pred_check
        %p203 = pneg %p202
      $region34: #{tpu_custom_call.1} parent=5 // pred_check_branch
        %205 = sbr.rel (%p203) target = $region36
      $region35: #{tpu_custom_call.1} parent=5 // pred_region
        // Predicated region
        $region37: #{tpu_custom_call.1} parent=35 // pred_check
          %p206 = pneg %p35
        $region38: #{tpu_custom_call.1} parent=35 // pred_check_branch
          %208 = sbr.rel (%p206) target = $region40
        $region39: #{tpu_custom_call.1} parent=35 // pred_region
          %p209 = scmp.lt.s32.totalorder %s15, 1
          %s210 = scalar_select %p209, %s15, 1
          %s211 = smul.addr %s210, 7
          %s212 = smul.addr %s211, 4
          %s213 = scalar_lea.vmem %s0, %s212
        $region40: #{tpu_custom_call.1} parent=35 // pred_fallthru
          _
      $region36: #{tpu_custom_call.1} parent=5 // pred_fallthru
        _
      %p214 = scmp.le.s32.totalorder 1, %s15
      %p215 = scmp.lt.s32.totalorder %s15, 3
      %p216 = pnand %p214, %p215
      %p217 = pneg %p216
      // Predicated region
      $region41: #{tpu_custom_call.1} parent=5 // pred_check
        _
      $region42: #{tpu_custom_call.1} parent=5 // pred_check_branch
        %219 = sbr.rel (%p216) target = $region44
      $region43: #{tpu_custom_call.1} parent=5 // pred_region
        %s220 = ssub.s32 %s15, 1
        %p221 = scmp.lt.s32.totalorder %s20, 1
        %s222 = scalar_select %p221, %s20, 1
        %s223 = smul.addr %s222, 7
        %s224 = smul.addr %s223, 4
        %s225 = scalar_lea.vmem %s0, %s224
        %p226 = pneg %p41
        %p227 = pneg %p38
        %p228 = pneg %p62
        %p229 = pneg %p59
        %p230 = pneg %p83
        %p231 = pneg %p80
        %p232 = pneg %p104
        %p233 = pneg %p101
        %p234 = pneg %p125
        %p235 = pneg %p122
        %p236 = pneg %p146
        %p237 = pneg %p143
        %p238 = pneg %p172
        %p239 = pneg %p169
        %s240 = sand.u32 %s159, 1
        %s241 = scalar_lea.sflag [#allocation3], %s240
        %s242 = sand.u32 %s159, 1
        %s243 = smul.addr %s242, 8
        %s244 = scalar_lea.vmem [#allocation2], %s243
        %p245 = scmp.lt.s32.totalorder %s20, 1
        %s246 = scalar_select %p245, %s20, 1
        %s247 = smul.addr %s246, 7
        %s248 = smul.addr %s247, 4
        %s249 = scalar_lea.vmem %s0, %s248
        %v251 = vld [vmem:[%s249] sm:$0xf]
        %v252 = vld [vmem:[%s249 + $0x4] sm:$0xf]
        %v253 = vld [vmem:[%s249 + $0x8] sm:$0xf]
        %v254 = vld [vmem:[%s249 + $0xc] sm:$0xf]
        %v255 = vld [vmem:[%s249 + $0x10] sm:$0xf]
        %v256 = vld [vmem:[%s249 + $0x14] sm:$0xf]
        %v257 = vld [vmem:[%s249 + $0x18] sm:$0xf]
        %v258 = vld [vmem:[%s2] sm:$0xf]
        %v259 = vld [vmem:[%s2 + $0x4] sm:$0xf]
        %v260 = vld [vmem:[%s3] sm:$0x1]
        %v262 = vlaneseq
        %v263 = vshrl.u32 %v262, 7
        %v264 = vsub.s32 0, %v263
        %v265 = vrot.slane %v260, %v264
        %v274 = vunpack.c.l.b16 %v251
        %v275 = vunpack.c.l.b16 %v252
        %v276 = vunpack.c.l.b16 %v253
        %v277 = vunpack.c.l.b16 %v254
        %v278 = vunpack.c.l.b16 %v255
        %v279 = vunpack.c.l.b16 %v256
        %v280 = vunpack.c.l.b16 %v257
        %v281 = vpack.c.b16 %v275, %v274
        %v282 = vpack.c.b16 %v277, %v276
        %v283 = vpack.c.b16 %v279, %v278
        %v284 = vpack.c.b16 %v280, %v280
        %v287 = vunpack.c.l.b16 %v258
        %v288 = vunpack.c.l.b16 %v259
        %v289 = vpack.c.b16 %v288, %v287
        %vm291 = vcmask 130048
        %v293 = vsel %vm291, %v281, 0
        %v296 = vsel %vm291, %v282, 0
        %v299 = vsel %vm291, %v283, 0
        %v302 = vsel %vm291, %v284, 0
        %304 = vmatprep.subr.bf16.mxu0 0
        %305 = vmatpush1.bf16.msra.mxu0 %v289
        %306 = vmatprep.subr.bf16.mxu0 0
        %307 = vmatpush1.bf16.msra.mxu0 0
        %308 = vmatprep.subr.bf16.mxu0 0
        %309 = vmatpush1.bf16.msra.mxu0 0
        %310 = vmatprep.subr.bf16.mxu0 0
        %311 = vmatpush1.bf16.msra.mxu0 0
        %312 = vmatprep.subr.bf16.mxu0 0
        %313 = vmatpush1.bf16.msra.mxu0 0
        %314 = vmatprep.subr.bf16.mxu0 0
        %315 = vmatpush1.bf16.msra.mxu0 0
        %316 = vmatprep.subr.bf16.mxu0 0
        %317 = vmatpush1.bf16.msra.mxu0 0
        %318 = vmatprep.subr.bf16.mxu0 0
        %319 = vmatpush1.bf16.msra.mxu0 0
        %320 = vmatprep.subr.bf16.mxu0 0
        %321 = vmatpush1.bf16.msra.mxu0 0
        %322 = vmatprep.subr.bf16.mxu0 0
        %323 = vmatpush1.bf16.msra.mxu0 0
        %324 = vmatprep.subr.bf16.mxu0 0
        %325 = vmatpush1.bf16.msra.mxu0 0
        %326 = vmatprep.subr.bf16.mxu0 0
        %327 = vmatpush1.bf16.msra.mxu0 0
        %328 = vmatprep.subr.bf16.mxu0 0
        %329 = vmatpush1.bf16.msra.mxu0 0
        %330 = vmatprep.subr.bf16.mxu0 0
        %331 = vmatpush1.bf16.msra.mxu0 0
        %332 = vmatprep.subr.bf16.mxu0 0
        %333 = vmatpush1.bf16.msra.mxu0 0
        %334 = vmatprep.subr.bf16.mxu0 0
        %335 = vmatpush1.bf16.msra.mxu0 0
        %336 = vmatprep.mubr.bf16.mxu0 0
        %337 = vmatmul.mubr.bf16.gmra.mrb[0].mxu0 %v293
        %v338 = vpop.f32.mrb[0].mxu0
        %v339 = vadd.f32 %v265, %v338
        %v340 = vpop.f32.mrb[0].mxu0
        %v341 = vpop.f32.mrb[0].mxu0
        %v342 = vadd.f32 %v265, %v341
        %v343 = vpop.f32.mrb[0].mxu0
        %344 = vmatprep.mubr.bf16.mxu0 0
        %345 = vmatmul.mubr.bf16.gmra.mrb[0].mxu0 %v296
        %v346 = vpop.f32.mrb[0].mxu0
        %v347 = vadd.f32 %v265, %v346
        %v348 = vpop.f32.mrb[0].mxu0
        %v349 = vpop.f32.mrb[0].mxu0
        %v350 = vadd.f32 %v265, %v349
        %v351 = vpop.f32.mrb[0].mxu0
        %352 = vmatprep.mubr.bf16.mxu0 0
        %353 = vmatmul.mubr.bf16.gmra.mrb[0].mxu0 %v299
        %v354 = vpop.f32.mrb[0].mxu0
        %v355 = vadd.f32 %v265, %v354
        %v356 = vpop.f32.mrb[0].mxu0
        %v357 = vpop.f32.mrb[0].mxu0
        %v358 = vadd.f32 %v265, %v357
        %v359 = vpop.f32.mrb[0].mxu0
        %360 = vmatprep.mubr.bf16.mxu0 0
        %361 = vmatmul.mubr.bf16.gmra.mrb[0].mxu0 %v302
        %v362 = vpop.f32.mrb[0].mxu0
        %v363 = vadd.f32 %v265, %v362
        %v364 = vpop.f32.mrb[0].mxu0
        %v365 = vpop.f32.mrb[0].mxu0
        %v366 = vpop.f32.mrb[0].mxu0
        %367 = vdwg.mxu0
        %v368 = vmax.f32 %v339, 0.0
        %v369 = vmax.f32 %v342, 0.0
        %v370 = vmax.f32 %v347, 0.0
        %v371 = vmax.f32 %v350, 0.0
        %v372 = vmax.f32 %v355, 0.0
        %v373 = vmax.f32 %v358, 0.0
        %v374 = vmax.f32 %v363, 0.0
        %v375 = vld [vmem:[%s1] sm:$0xf]
        %v376 = vpack.c.bf16 %v369, %v368
        %v377 = vpack.c.bf16 %v371, %v370
        %v378 = vpack.c.bf16 %v373, %v372
        %v379 = vpack.c.bf16 %v374, %v374
        %vm380 = vcmask 457728
        %v382 = vsel %vm380, %v375, 0
        %vm384 = vcmask 1043456
        %v386 = vsel %vm384, %v379, 0
        %388 = vmatprep.subr.bf16.mxu0 0
        %389 = vmatpush1.bf16.msra.mxu0 %v376
        %390 = vmatprep.subr.bf16.mxu0 0
        %391 = vmatpush1.bf16.msra.mxu0 %v377
        %392 = vmatprep.subr.bf16.mxu0 0
        %393 = vmatpush1.bf16.msra.mxu0 %v378
        %394 = vmatprep.subr.bf16.mxu0 0
        %395 = vmatpush1.bf16.msra.mxu0 %v386
        %396 = vmatprep.subr.bf16.mxu0 0
        %397 = vmatpush1.bf16.msra.mxu0 0
        %398 = vmatprep.subr.bf16.mxu0 0
        %399 = vmatpush1.bf16.msra.mxu0 0
        %400 = vmatprep.subr.bf16.mxu0 0
        %401 = vmatpush1.bf16.msra.mxu0 0
        %402 = vmatprep.subr.bf16.mxu0 0
        %403 = vmatpush1.bf16.msra.mxu0 0
        %404 = vmatprep.subr.bf16.mxu0 0
        %405 = vmatpush1.bf16.msra.mxu0 0
        %406 = vmatprep.subr.bf16.mxu0 0
        %407 = vmatpush1.bf16.msra.mxu0 0
        %408 = vmatprep.subr.bf16.mxu0 0
        %409 = vmatpush1.bf16.msra.mxu0 0
        %410 = vmatprep.subr.bf16.mxu0 0
        %411 = vmatpush1.bf16.msra.mxu0 0
        %412 = vmatprep.subr.bf16.mxu0 0
        %413 = vmatpush1.bf16.msra.mxu0 0
        %414 = vmatprep.subr.bf16.mxu0 0
        %415 = vmatpush1.bf16.msra.mxu0 0
        %416 = vmatprep.subr.bf16.mxu0 0
        %417 = vmatpush1.bf16.msra.mxu0 0
        %418 = vmatprep.subr.bf16.mxu0 0
        %419 = vmatpush1.bf16.msra.mxu0 0
        %420 = vmatprep.mubr.bf16.mxu0 0
        %421 = vmatmul.mubr.bf16.gmra.mrb[0].mxu0 %v382
        %v422 = vpop.f32.mrb[0].mxu0
        %v423 = vadd.f32 0.0, %v422
        %v424 = vpop.f32.mrb[0].mxu0
        %v425 = vpop.f32.mrb[0].mxu0
        %v426 = vpop.f32.mrb[0].mxu0
        %427 = vdwg.mxu0
        %v428 = vpack.c.bf16 %v423, %v423
        %v429 = vld [vmem:[%s4] sm:$0xf]
        %v430 = vld [vmem:[%s4 + $0x4] sm:$0xf]
        %v431 = vld [vmem:[%s4 + $0x8] sm:$0xf]
        %v432 = vld [vmem:[%s4 + $0xc] sm:$0xf]
        %v433 = vld [vmem:[%s5] sm:$0x1]
        %v435 = vlaneseq
        %v436 = vshrl.u32 %v435, 7
        %v437 = vsub.s32 0, %v436
        %v438 = vrot.slane %v433, %v437
        %v444 = vunpack.c.l.b16 %v429
        %v445 = vunpack.c.l.b16 %v430
        %v446 = vunpack.c.l.b16 %v431
        %v447 = vunpack.c.l.b16 %v432
        %v448 = vpack.c.b16 %v445, %v444
        %v449 = vpack.c.b16 %v447, %v446
        %vm452 = vcmask 261120
        %v454 = vsel %vm452, %v428, 0
        %456 = vmatprep.subr.bf16.mxu0 0
        %457 = vmatpush1.bf16.msra.mxu0 %v448
        %458 = vmatprep.subr.bf16.mxu0 0
        %459 = vmatpush1.bf16.msra.mxu0 %v449
        %460 = vmatprep.subr.bf16.mxu0 0
        %461 = vmatpush1.bf16.msra.mxu0 0
        %462 = vmatprep.subr.bf16.mxu0 0
        %463 = vmatpush1.bf16.msra.mxu0 0
        %464 = vmatprep.subr.bf16.mxu0 0
        %465 = vmatpush1.bf16.msra.mxu0 0
        %466 = vmatprep.subr.bf16.mxu0 0
        %467 = vmatpush1.bf16.msra.mxu0 0
        %468 = vmatprep.subr.bf16.mxu0 0
        %469 = vmatpush1.bf16.msra.mxu0 0
        %470 = vmatprep.subr.bf16.mxu0 0
        %471 = vmatpush1.bf16.msra.mxu0 0
        %472 = vmatprep.subr.bf16.mxu0 0
        %473 = vmatpush1.bf16.msra.mxu0 0
        %474 = vmatprep.subr.bf16.mxu0 0
        %475 = vmatpush1.bf16.msra.mxu0 0
        %476 = vmatprep.subr.bf16.mxu0 0
        %477 = vmatpush1.bf16.msra.mxu0 0
        %478 = vmatprep.subr.bf16.mxu0 0
        %479 = vmatpush1.bf16.msra.mxu0 0
        %480 = vmatprep.subr.bf16.mxu0 0
        %481 = vmatpush1.bf16.msra.mxu0 0
        %482 = vmatprep.subr.bf16.mxu0 0
        %483 = vmatpush1.bf16.msra.mxu0 0
        %484 = vmatprep.subr.bf16.mxu0 0
        %485 = vmatpush1.bf16.msra.mxu0 0
        %486 = vmatprep.subr.bf16.mxu0 0
        %487 = vmatpush1.bf16.msra.mxu0 0
        %488 = vmatprep.mubr.bf16.mxu0 0
        %489 = vmatmul.mubr.bf16.gmra.mrb[0].mxu0 %v454
        %v490 = vpop.f32.mrb[0].mxu0
        %v491 = vadd.f32 %v438, %v490
        %v492 = vpop.f32.mrb[0].mxu0
        %v493 = vpop.f32.mrb[0].mxu0
        %v494 = vpop.f32.mrb[0].mxu0
        %495 = vdwg.mxu0
        %496 = vst [vmem:[%s244] sm:$0xff] %v491
        %s497 = sand.u32 %s159, 1
        %s498 = scalar_lea.sflag [#allocation3], %s497
        %s499 = sand.u32 %s159, 1
        %s500 = smul.addr %s499, 8
        %s501 = scalar_lea.vmem [#allocation2], %s500
        // Predicated region
        $region45: #{tpu_custom_call.1} parent=43 // pred_check
          %p502 = pneg %p169
        $region46: #{tpu_custom_call.1} parent=43 // pred_check_branch
          %504 = sbr.rel (%p502) target = $region48
        $region47: #{tpu_custom_call.1} parent=43 // pred_region
          %s506 = ssub.s32 128, 128
          %507 = vsyncadd %s498, %s506
          %s508 = smul.addr %s20, 128
          %s509 = scalar_lea.hbm %s6, %s508
          %s511 = sshll.u32 %s501, 4
          %s512 = int_to_ptr.vmem [resolvable:$true] %s511
          %514 = dma.vmem_to_hbm [thread:$0]  %s512, 128, %s509, %s498
        $region48: #{tpu_custom_call.1} parent=43 // pred_fallthru
          _
      $region44: #{tpu_custom_call.1} parent=5 // pred_fallthru
        _
      %p515 = scmp.le.s32.totalorder 2, %s15
      // Predicated region
      $region49: #{tpu_custom_call.1} parent=5 // pred_check
        %p516 = pneg %p515
      $region50: #{tpu_custom_call.1} parent=5 // pred_check_branch
        %518 = sbr.rel (%p516) target = $region52
      $region51: #{tpu_custom_call.1} parent=5 // pred_region
        %s519 = ssub.s32 %s15, 2
        // Predicated region
        $region53: #{tpu_custom_call.1} parent=51 // pred_check
          %p520 = pneg %p175
        $region54: #{tpu_custom_call.1} parent=51 // pred_check_branch
          %522 = sbr.rel (%p520) target = $region56
        $region55: #{tpu_custom_call.1} parent=51 // pred_region
          %s523 = sand.u32 %s160, 1
          %s524 = scalar_lea.sflag [#allocation3], %s523
          %s525 = sand.u32 %s160, 1
          %s526 = smul.addr %s525, 8
          %s527 = scalar_lea.vmem [#allocation2], %s526
          %528 = dma.done %s524, 128
        $region56: #{tpu_custom_call.1} parent=51 // pred_fallthru
          _
      $region52: #{tpu_custom_call.1} parent=5 // pred_fallthru
        _
    $region6: #{tpu_custom_call.1} parent=1 // loop_footer
      %s19 = sadd.s32 1, %s15
    $region7: #{tpu_custom_call.1} parent=1 // loop_footer_branch
      %14 = sbr.rel target = $region3
    $region8: #{tpu_custom_call.1} parent=1 // loop_exit
      _
    %529 = vsyncpa [#allocation3], 1
    %s530 = scalar_lea.sflag [#allocation3], 1
    %531 = vsyncpa %s530, 1

</llo_original>
